<compile_context>
chip_gen: v7x
topology: tpu7x:2x2x1
jax: 0.10.0
libtpu: 0.0.40
codegen_flags: <defaults>
</compile_context>

<pallas_src>
from typing import Any, NamedTuple

import jax
import jax.numpy as jnp
from jax.experimental import pallas as pl
from jax.experimental.pallas import tpu as pltpu

_LANE = 128


def _round_up(v, m):
    return ((v + m - 1) // m) * m


class NetMeta(NamedTuple):
    in_dim: int
    in_dim_padded: int
    out_dim: int            # true (unpadded) number of output classes
    compute_dtype: Any      # MXU operand dtype (bf16)


def _make_fused_kernel(num_hidden, compute_dtype):
    """Fused MLP kernel: num_hidden (masked-folded) linear+relu, then linear."""

    def kernel(*refs):
        # refs = [x_ref, (w_ref, b_ref) * num_hidden, w_out_ref, b_out_ref, o_ref]
        x_ref = refs[0]
        o_ref = refs[-1]

        h = x_ref[...]                                    # (tm, Kpad) bf16
        idx = 1
        for _ in range(num_hidden):
            w_ref, b_ref = refs[idx], refs[idx + 1]
            idx += 2
            acc = jnp.dot(h.astype(compute_dtype), w_ref[...],
                          preferred_element_type=jnp.float32)
            h = jnp.maximum(acc + b_ref[...], 0.0)        # bias + ReLU in f32

        w_ref, b_ref = refs[idx], refs[idx + 1]
        y = jnp.dot(h.astype(compute_dtype), w_ref[...],
                    preferred_element_type=jnp.float32) + b_ref[...]
        o_ref[...] = y.astype(o_ref.dtype)                # lane-dense (tm, 128)

    return kernel


def _pick_tm(M, m_tile):
    """Batch tile: split across 2 TCs (v7x) when possible, cap at m_tile."""
    if M <= 8:
        return M
    tm = min(m_tile, _round_up(pl.cdiv(M, 2), 8))
    return min(tm, _round_up(M, 8))


def fused_net_forward(x2d, layers, *, m_tile=256):
    """x2d: (M, Kpad) compute-dtype; layers: list of (w_t(K,N) bf16, bias(1,N) f32)."""
    M, K = x2d.shape
    hidden = layers[:-1]
    w_out, b_out = layers[-1]
    n_pad = w_out.shape[1]

    tm = _pick_tm(M, m_tile)
    grid = (pl.cdiv(M, tm),)

    operands = [x2d]
    in_specs = [pl.BlockSpec((tm, K), lambda i: (i, 0))]
    for (wt, b2) in hidden:
        kin, kout = wt.shape
        operands += [wt, b2]
        in_specs += [
            pl.BlockSpec((kin, kout), lambda i: (0, 0)),   # weight: VMEM-resident
            pl.BlockSpec((1, kout), lambda i: (0, 0)),     # bias row
        ]
    kin, kout = w_out.shape
    operands += [w_out, b_out]
    in_specs += [
        pl.BlockSpec((kin, kout), lambda i: (0, 0)),
        pl.BlockSpec((1, kout), lambda i: (0, 0)),
    ]

    kernel = _make_fused_kernel(len(hidden), x2d.dtype)
    return pl.pallas_call(
        kernel,
        out_shape=jax.ShapeDtypeStruct((M, n_pad), jnp.float32),
        grid=grid,
        in_specs=in_specs,
        out_specs=pl.BlockSpec((tm, n_pad), lambda i: (i, 0)),
        compiler_params=pltpu.CompilerParams(
            dimension_semantics=("parallel",)),
    )(*operands)


def net_forward(x, layers, meta: NetMeta):
    """Reproduces Net.forward: flatten -> (masked linear + relu)* -> linear."""
    x2d = x.reshape(-1, meta.in_dim).astype(jnp.float32)
    if meta.in_dim_padded != meta.in_dim:
        x2d = jnp.pad(x2d, ((0, 0), (0, meta.in_dim_padded - meta.in_dim)))
    x2d = x2d.astype(meta.compute_dtype)          # halve input DMA bytes
    y = fused_net_forward(x2d, layers)
    return y[:, :meta.out_dim]                    # drop lane padding outside kernel


def init_net_params(key, input_dim=28 * 28, hidden_dims=(256, 256), output_dim=10):
    """nn.Linear-style init, PyTorch (out_features, in_features) layout."""
    params = []
    prev = input_dim
    dims = list(hidden_dims) + [output_dim]
    for h in dims:
        key, kw, kb = jax.random.split(key, 3)
        bound = 1.0 / jnp.sqrt(jnp.float32(prev))
        w = jax.random.uniform(kw, (h, prev), jnp.float32, -bound, bound)
        b = jax.random.uniform(kb, (h,), jnp.float32, -bound, bound)
        mask = jnp.ones((h,), jnp.float32)
        params.append((w, b, mask))
        prev = h
    return params


def prepare_params(params, *, compute_dtype=jnp.bfloat16):
    """One-time layout conversion (runs only when weights/masks change):
       * weight (N,K) -> (K,N), prune mask folded into hidden-layer weights,
       * weights cast to bf16, biases kept as f32 (1,N) rows,
       * input K padded to a multiple of 128, output N padded to 128."""
    in_dim = params[0][0].shape[1]
    out_dim = params[-1][0].shape[0]
    k_pad = _round_up(in_dim, _LANE)
    n_layers = len(params)

    layers = []
    for li, (w, b, m) in enumerate(params):
        wt = jnp.asarray(w.T)                              # (K, N) f32
        if li < n_layers - 1:                              # fold 0/1 mask (exact)
            wt = wt * m[None, :]
        if li == 0 and k_pad != wt.shape[0]:               # lane-align K
            wt = jnp.pad(wt, ((0, k_pad - wt.shape[0]), (0, 0)))
        b_row = b.reshape(1, -1).astype(jnp.float32)
        if li == n_layers - 1:                             # lane-dense output
            n_out = wt.shape[1]
            n_p = _round_up(n_out, _LANE)
            if n_p != n_out:
                wt = jnp.pad(wt, ((0, 0), (0, n_p - n_out)))
                b_row = jnp.pad(b_row, ((0, 0), (0, n_p - n_out)))
        layers.append((wt.astype(compute_dtype), b_row))

    meta = NetMeta(in_dim=in_dim, in_dim_padded=k_pad, out_dim=out_dim,
                   compute_dtype=compute_dtype)
    return layers, meta


if __name__ == "__main__":
    key = jax.random.PRNGKey(0)
    key, kx, kp = jax.random.split(key, 3)

    # Small MNIST-like batch, NCHW like the PyTorch dataloader would feed.
    batch = 8
    x = jax.random.normal(kx, (batch, 1, 28, 28), dtype=jnp.float32)

    # Small hidden dims; input_dim fixed at 784 by forward's view(-1, 28*28).
    params = init_net_params(kp, input_dim=28 * 28, hidden_dims=(256, 256),
                             output_dim=10)

    # Simulate a pruned neuron in layer 0 (what update_masks would do).
    w0, b0, m0 = params[0]
    m0 = m0.at[3].set(0.0)
    params[0] = (w0, b0, m0)

    # One-time conversion to kernel layout (mask fold, bf16, lane padding).
    layers, meta = prepare_params(params)

    fwd = jax.jit(net_forward, static_argnums=2)
    out = fwd(x, layers, meta)
    out = jax.block_until_ready(out)
    assert out.shape == (batch, 10), out.shape

    # --- f32 reference: exactly the PyTorch math (mask on weight rows). ---
    ref = x.reshape(-1, 28 * 28).astype(jnp.float32)
    for (w, b, m) in params[:-1]:
        ref = jnp.maximum(ref @ (w * m[:, None]).T + b, 0.0)
    w_last, b_last, _ = params[-1]
    ref_f32 = ref @ w_last.T + b_last

    # --- bf16-mirror reference: same dtype plumbing the kernel uses. ---
    h = x.reshape(-1, 28 * 28).astype(jnp.float32)
    for (w, b, m) in params[:-1]:
        wt = (w.T * m[None, :]).astype(jnp.bfloat16)
        h = jnp.maximum(
            jnp.dot(h.astype(jnp.bfloat16), wt,
                    preferred_element_type=jnp.float32) + b, 0.0)
    ref_bf16 = jnp.dot(h.astype(jnp.bfloat16), w_last.T.astype(jnp.bfloat16),
                       preferred_element_type=jnp.float32) + b_last

    # Tight check vs. the bf16-mirror; loose check vs. the exact f32 reference
    # (tolerance relaxed because MXU operands are bf16 with f32 accumulation).
    assert jnp.allclose(out, ref_bf16, atol=1e-2, rtol=1e-2), "mismatch vs bf16 mirror"
    assert jnp.allclose(out, ref_f32, atol=5e-2, rtol=5e-2), "mismatch vs f32 reference"

    print("KERNEL_OK")
</pallas_src>

<mosaic_0001>
module attributes {stable_mosaic.version = 11 : i64} {
  func.func @kernel(%arg0: i32, %arg1: memref<8x896xbf16, #tpu.memory_space<vmem>>, %arg2: memref<896x256xbf16, #tpu.memory_space<vmem>>, %arg3: memref<1x256xf32, #tpu.memory_space<vmem>>, %arg4: memref<256x256xbf16, #tpu.memory_space<vmem>>, %arg5: memref<1x256xf32, #tpu.memory_space<vmem>>, %arg6: memref<256x128xbf16, #tpu.memory_space<vmem>>, %arg7: memref<1x128xf32, #tpu.memory_space<vmem>>, %arg8: memref<8x128xf32, #tpu.memory_space<vmem>>) attributes {dimension_semantics = [#tpu.dimension_semantics<parallel>], iteration_bounds = array<i64: 1>, scalar_prefetch = 0 : i64, scratch_operands = 0 : i64, tpu.core_type = #tpu.core_type<tc>, window_params = [{transform_indices = @transform_0, window_bounds = array<i64: 8, 896>}, {pipeline_mode = #tpu.pipeline_mode<synchronous>, transform_indices = @transform_1, window_bounds = array<i64: 896, 256>}, {pipeline_mode = #tpu.pipeline_mode<synchronous>, transform_indices = @transform_2, window_bounds = array<i64: 1, 256>}, {pipeline_mode = #tpu.pipeline_mode<synchronous>, transform_indices = @transform_3, window_bounds = array<i64: 256, 256>}, {pipeline_mode = #tpu.pipeline_mode<synchronous>, transform_indices = @transform_4, window_bounds = array<i64: 1, 256>}, {pipeline_mode = #tpu.pipeline_mode<synchronous>, transform_indices = @transform_5, window_bounds = array<i64: 256, 128>}, {pipeline_mode = #tpu.pipeline_mode<synchronous>, transform_indices = @transform_6, window_bounds = array<i64: 1, 128>}, {transform_indices = @transform_7, window_bounds = array<i64: 8, 128>}]} {
    %c0 = arith.constant 0 : index
    %c0_0 = arith.constant 0 : index
    %0 = vector.load %arg1[%c0, %c0_0] : memref<8x896xbf16, #tpu.memory_space<vmem>>, vector<8x896xbf16>
    %c0_1 = arith.constant 0 : index
    %c0_2 = arith.constant 0 : index
    %1 = vector.load %arg2[%c0_1, %c0_2] : memref<896x256xbf16, #tpu.memory_space<vmem>>, vector<896x256xbf16>
    %cst = arith.constant dense<0.000000e+00> : vector<8x256xf32>
    %2 = tpu.matmul %0, %1, %cst {dimension_numbers = #tpu.dot_dimension_numbers<[1], [0], [0], [1], [0, 0, 1, 1], [], []>} : vector<8x896xbf16>, vector<896x256xbf16>, vector<8x256xf32> -> vector<8x256xf32>
    %c0_3 = arith.constant 0 : index
    %c0_4 = arith.constant 0 : index
    %3 = vector.load %arg3[%c0_3, %c0_4] : memref<1x256xf32, #tpu.memory_space<vmem>>, vector<1x256xf32>
    %4 = vector.broadcast %3 : vector<1x256xf32> to vector<8x256xf32>
    %5 = arith.addf %2, %4 : vector<8x256xf32>
    %cst_5 = arith.constant 0.000000e+00 : f32
    %6 = vector.broadcast %cst_5 : f32 to vector<8x256xf32>
    %7 = arith.maximumf %5, %6 : vector<8x256xf32>
    %8 = arith.truncf %7 : vector<8x256xf32> to vector<8x256xbf16>
    %c0_6 = arith.constant 0 : index
    %c0_7 = arith.constant 0 : index
    %9 = vector.load %arg4[%c0_6, %c0_7] : memref<256x256xbf16, #tpu.memory_space<vmem>>, vector<256x256xbf16>
    %cst_8 = arith.constant dense<0.000000e+00> : vector<8x256xf32>
    %10 = tpu.matmul %8, %9, %cst_8 {dimension_numbers = #tpu.dot_dimension_numbers<[1], [0], [0], [1], [0, 0, 1, 1], [], []>} : vector<8x256xbf16>, vector<256x256xbf16>, vector<8x256xf32> -> vector<8x256xf32>
    %c0_9 = arith.constant 0 : index
    %c0_10 = arith.constant 0 : index
    %11 = vector.load %arg5[%c0_9, %c0_10] : memref<1x256xf32, #tpu.memory_space<vmem>>, vector<1x256xf32>
    %12 = vector.broadcast %11 : vector<1x256xf32> to vector<8x256xf32>
    %13 = arith.addf %10, %12 : vector<8x256xf32>
    %cst_11 = arith.constant 0.000000e+00 : f32
    %14 = vector.broadcast %cst_11 : f32 to vector<8x256xf32>
    %15 = arith.maximumf %13, %14 : vector<8x256xf32>
    %16 = arith.truncf %15 : vector<8x256xf32> to vector<8x256xbf16>
    %c0_12 = arith.constant 0 : index
    %c0_13 = arith.constant 0 : index
    %17 = vector.load %arg6[%c0_12, %c0_13] : memref<256x128xbf16, #tpu.memory_space<vmem>>, vector<256x128xbf16>
    %cst_14 = arith.constant dense<0.000000e+00> : vector<8x128xf32>
    %18 = tpu.matmul %16, %17, %cst_14 {dimension_numbers = #tpu.dot_dimension_numbers<[1], [0], [0], [1], [0, 0, 1, 1], [], []>} : vector<8x256xbf16>, vector<256x128xbf16>, vector<8x128xf32> -> vector<8x128xf32>
    %c0_15 = arith.constant 0 : index
    %c0_16 = arith.constant 0 : index
    %19 = vector.load %arg7[%c0_15, %c0_16] : memref<1x128xf32, #tpu.memory_space<vmem>>, vector<1x128xf32>
    %20 = vector.broadcast %19 : vector<1x128xf32> to vector<8x128xf32>
    %21 = arith.addf %18, %20 : vector<8x128xf32>
    %c0_17 = arith.constant 0 : index
    %c0_18 = arith.constant 0 : index
    %22 = vector.load %arg8[%c0_17, %c0_18] : memref<8x128xf32, #tpu.memory_space<vmem>>, vector<8x128xf32>
    tpu.vector_store %arg8[%c0_17, %c0_18], %21 {strides = array<i32>} : memref<8x128xf32, #tpu.memory_space<vmem>>, vector<8x128xf32>,
    return
  }
  func.func @transform_0(%arg0: i32) -> (i32, i32) {
    %c0_i32 = arith.constant 0 : i32
    %c0_i32_0 = arith.constant 0 : i32
    return %arg0, %c0_i32 : i32, i32
  }
  func.func @transform_1(%arg0: i32) -> (i32, i32) {
    %c0_i32 = arith.constant 0 : i32
    %c0_i32_0 = arith.constant 0 : i32
    %c0_i32_1 = arith.constant 0 : i32
    return %c0_i32, %c0_i32_0 : i32, i32
  }
  func.func @transform_2(%arg0: i32) -> (i32, i32) {
    %c0_i32 = arith.constant 0 : i32
    %c0_i32_0 = arith.constant 0 : i32
    %c0_i32_1 = arith.constant 0 : i32
    return %c0_i32, %c0_i32_0 : i32, i32
  }
  func.func @transform_3(%arg0: i32) -> (i32, i32) {
    %c0_i32 = arith.constant 0 : i32
    %c0_i32_0 = arith.constant 0 : i32
    %c0_i32_1 = arith.constant 0 : i32
    return %c0_i32, %c0_i32_0 : i32, i32
  }
  func.func @transform_4(%arg0: i32) -> (i32, i32) {
    %c0_i32 = arith.constant 0 : i32
    %c0_i32_0 = arith.constant 0 : i32
    %c0_i32_1 = arith.constant 0 : i32
    return %c0_i32, %c0_i32_0 : i32, i32
  }
  func.func @transform_5(%arg0: i32) -> (i32, i32) {
    %c0_i32 = arith.constant 0 : i32
    %c0_i32_0 = arith.constant 0 : i32
    %c0_i32_1 = arith.constant 0 : i32
    return %c0_i32, %c0_i32_0 : i32, i32
  }
  func.func @transform_6(%arg0: i32) -> (i32, i32) {
    %c0_i32 = arith.constant 0 : i32
    %c0_i32_0 = arith.constant 0 : i32
    %c0_i32_1 = arith.constant 0 : i32
    return %c0_i32, %c0_i32_0 : i32, i32
  }
  func.func @transform_7(%arg0: i32) -> (i32, i32) {
    %c0_i32 = arith.constant 0 : i32
    %c0_i32_0 = arith.constant 0 : i32
    return %arg0, %c0_i32 : i32, i32
  }
}

</mosaic_0001>

<llo_original>
// kernel: net_forward.1
$region0: #{net_forward.1}
  #allocation0 [shape = 'u32[]', space=smem, size = 0x4, offset = 0x4, fixed_abs, tag = 'smem constant byte address 0x4 - core index']
  #allocation1 [shape = 'u32[144,128]{1,0:T(1,128)}', space=vmem, size = 0x12000, scoped, tag = 'internal scratch']
  %s0 = inlined_call_operand.vmem [shape: bf16[8,896], index: 0, kind: input, shape index: {}]
  %s1 = inlined_call_operand.hbm [shape: bf16[896,256], index: 1, kind: input, shape index: {}]
  %s2 = inlined_call_operand.vmem [shape: f32[1,256], index: 2, kind: input, shape index: {}]
  %s3 = inlined_call_operand.vmem [shape: bf16[256,256], index: 3, kind: input, shape index: {}]
  %s4 = inlined_call_operand.vmem [shape: f32[1,256], index: 4, kind: input, shape index: {}]
  %s5 = inlined_call_operand.vmem [shape: bf16[256,128], index: 5, kind: input, shape index: {}]
  %s6 = inlined_call_operand.vmem [shape: f32[1,128], index: 6, kind: input, shape index: {}]
  %s7 = inlined_call_operand.hbm [shape: f32[8,128], index: 7, kind: output, shape index: {}]
  %s8 = sld [smem:[#allocation0]]
  $region42: #{net_forward.1} parent=0
    _
  %s10 = ssub.s32 1, %s8
  %s11 = scalar_select 0, %s10, %s8
  $region1: #{net_forward.1} parent=0
    #allocation2 [shape = 'u8[458752]{0}', space=vmem, size = 0x70000, scoped, tag = 'input window, operand 1, single buffered']
    #allocation3 [shape = 's32[1]{0}', space=sflag, size = 0x4, scoped, tag = 'scoped memory for net_forward.1']
    #allocation4 [shape = 's32[1]{0}', space=sflag, size = 0x4, scoped, tag = 'scoped memory for net_forward.1']
    #allocation5 [shape = 'u8[4096]{0}', space=vmem, size = 0x1000, scoped, tag = 'output window, operand 0, single buffered']
    %12 = vsyncpa [#allocation3], 0
    %13 = vsyncpa [#allocation4], 0
    // Predicated region
    $region2: #{net_forward.1} parent=1 // pred_check
      _
    $region3: #{net_forward.1} parent=1 // pred_check_branch
      %15 = sbr.rel (0) target = $region5
    $region4: #{net_forward.1} parent=1 // pred_region
      _
    $region5: #{net_forward.1} parent=1 // pred_fallthru
      _
    // Predicated region
    $region6: #{net_forward.1} parent=1 // pred_check
      _
    $region7: #{net_forward.1} parent=1 // pred_check_branch
      %17 = sbr.rel (0) target = $region9
    $region8: #{net_forward.1} parent=1 // pred_region
      %s19 = ssub.s32 14336, 14336
      %20 = vsyncadd [#allocation3], %s19
      %s21 = sshll.u32 [#allocation2], 4
      %s22 = int_to_ptr.vmem [resolvable:$true] %s21
      %27 = dma.hbm_to_vmem [thread:$0]  %s1, 14336, %s22, [#allocation3], 128, 128, 8
    $region9: #{net_forward.1} parent=1 // pred_fallthru
      _
    // Predicated region
    $region10: #{net_forward.1} parent=1 // pred_check
      _
    $region11: #{net_forward.1} parent=1 // pred_check_branch
      %29 = sbr.rel (0) target = $region13
    $region12: #{net_forward.1} parent=1 // pred_region
      _
    $region13: #{net_forward.1} parent=1 // pred_fallthru
      _
    // Predicated region
    $region14: #{net_forward.1} parent=1 // pred_check
      _
    $region15: #{net_forward.1} parent=1 // pred_check_branch
      %31 = sbr.rel (0) target = $region17
    $region16: #{net_forward.1} parent=1 // pred_region
      _
    $region17: #{net_forward.1} parent=1 // pred_fallthru
      _
    // Predicated region
    $region18: #{net_forward.1} parent=1 // pred_check
      _
    $region19: #{net_forward.1} parent=1 // pred_check_branch
      %33 = sbr.rel (0) target = $region21
    $region20: #{net_forward.1} parent=1 // pred_region
      _
    $region21: #{net_forward.1} parent=1 // pred_fallthru
      _
    // Predicated region
    $region22: #{net_forward.1} parent=1 // pred_check
      _
    $region23: #{net_forward.1} parent=1 // pred_check_branch
      %35 = sbr.rel (0) target = $region25
    $region24: #{net_forward.1} parent=1 // pred_region
      _
    $region25: #{net_forward.1} parent=1 // pred_fallthru
      _
    // Predicated region
    $region26: #{net_forward.1} parent=1 // pred_check
      _
    $region27: #{net_forward.1} parent=1 // pred_check_branch
      %37 = sbr.rel (0) target = $region29
    $region28: #{net_forward.1} parent=1 // pred_region
      _
    $region29: #{net_forward.1} parent=1 // pred_fallthru
      _
    // Predicated region
    $region30: #{net_forward.1} parent=1 // pred_check
      _
    $region31: #{net_forward.1} parent=1 // pred_check_branch
      %39 = sbr.rel (0) target = $region33
    $region32: #{net_forward.1} parent=1 // pred_region
      %40 = dma.done [#allocation3], 14336
    $region33: #{net_forward.1} parent=1 // pred_fallthru
      _
    %v42 = vld [vmem:[%s0] sm:$0xff]
    %v43 = vld [vmem:[%s0 + $0x8] sm:$0xff]
    %v44 = vld [vmem:[%s0 + $0x10] sm:$0xff]
    %v45 = vld [vmem:[%s0 + $0x18] sm:$0xf]
    %v46 = vld [vmem:[#allocation2] sm:$0xff]
    %v47 = vld [vmem:[#allocation2 + $0x8] sm:$0xff]
    %v48 = vld [vmem:[#allocation2 + $0x10] sm:$0xff]
    %v49 = vld [vmem:[#allocation2 + $0x18] sm:$0xff]
    %v50 = vld [vmem:[#allocation2 + $0x20] sm:$0xff]
    %v51 = vld [vmem:[#allocation2 + $0x28] sm:$0xff]
    %v52 = vld [vmem:[#allocation2 + $0x30] sm:$0xff]
    %v53 = vld [vmem:[#allocation2 + $0x38] sm:$0xff]
    %v54 = vld [vmem:[#allocation2 + $0x40] sm:$0xff]
    %v55 = vld [vmem:[#allocation2 + $0x48] sm:$0xff]
    %v56 = vld [vmem:[#allocation2 + $0x50] sm:$0xff]
    %v57 = vld [vmem:[#allocation2 + $0x58] sm:$0xff]
    %v58 = vld [vmem:[#allocation2 + $0x60] sm:$0xff]
    %v59 = vld [vmem:[#allocation2 + $0x68] sm:$0xff]
    %v60 = vld [vmem:[#allocation2 + $0x70] sm:$0xff]
    %v61 = vld [vmem:[#allocation2 + $0x78] sm:$0xff]
    %v62 = vld [vmem:[#allocation2 + $0x80] sm:$0xff]
    %v63 = vld [vmem:[#allocation2 + $0x88] sm:$0xff]
    %v64 = vld [vmem:[#allocation2 + $0x90] sm:$0xff]
    %v65 = vld [vmem:[#allocation2 + $0x98] sm:$0xff]
    %v66 = vld [vmem:[#allocation2 + $0xa0] sm:$0xff]
    %v67 = vld [vmem:[#allocation2 + $0xa8] sm:$0xff]
    %v68 = vld [vmem:[#allocation2 + $0xb0] sm:$0xff]
    %v69 = vld [vmem:[#allocation2 + $0xb8] sm:$0xff]
    %v70 = vld [vmem:[#allocation2 + $0xc0] sm:$0xff]
    %v71 = vld [vmem:[#allocation2 + $0xc8] sm:$0xff]
    %v72 = vld [vmem:[#allocation2 + $0xd0] sm:$0xff]
    %v73 = vld [vmem:[#allocation2 + $0xd8] sm:$0xff]
    %v74 = vld [vmem:[#allocation2 + $0xe0] sm:$0xff]
    %v75 = vld [vmem:[#allocation2 + $0xe8] sm:$0xff]
    %v76 = vld [vmem:[#allocation2 + $0xf0] sm:$0xff]
    %v77 = vld [vmem:[#allocation2 + $0xf8] sm:$0xff]
    %v78 = vld [vmem:[#allocation2 + $0x100] sm:$0xff]
    %v79 = vld [vmem:[#allocation2 + $0x108] sm:$0xff]
    %v80 = vld [vmem:[#allocation2 + $0x110] sm:$0xff]
    %v81 = vld [vmem:[#allocation2 + $0x118] sm:$0xff]
    %v82 = vld [vmem:[#allocation2 + $0x120] sm:$0xff]
    %v83 = vld [vmem:[#allocation2 + $0x128] sm:$0xff]
    %v84 = vld [vmem:[#allocation2 + $0x130] sm:$0xff]
    %v85 = vld [vmem:[#allocation2 + $0x138] sm:$0xff]
    %v86 = vld [vmem:[#allocation2 + $0x140] sm:$0xff]
    %v87 = vld [vmem:[#allocation2 + $0x148] sm:$0xff]
    %v88 = vld [vmem:[#allocation2 + $0x150] sm:$0xff]
    %v89 = vld [vmem:[#allocation2 + $0x158] sm:$0xff]
    %v90 = vld [vmem:[#allocation2 + $0x160] sm:$0xff]
    %v91 = vld [vmem:[#allocation2 + $0x168] sm:$0xff]
    %v92 = vld [vmem:[#allocation2 + $0x170] sm:$0xff]
    %v93 = vld [vmem:[#allocation2 + $0x178] sm:$0xff]
    %v94 = vld [vmem:[#allocation2 + $0x180] sm:$0xff]
    %v95 = vld [vmem:[#allocation2 + $0x188] sm:$0xff]
    %v96 = vld [vmem:[#allocation2 + $0x190] sm:$0xff]
    %v97 = vld [vmem:[#allocation2 + $0x198] sm:$0xff]
    %v98 = vld [vmem:[#allocation2 + $0x1a0] sm:$0xff]
    %v99 = vld [vmem:[#allocation2 + $0x1a8] sm:$0xff]
    %v100 = vld [vmem:[#allocation2 + $0x1b0] sm:$0xff]
    %v101 = vld [vmem:[#allocation2 + $0x1b8] sm:$0xff]
    %v102 = vld [vmem:[#allocation2 + $0x1c0] sm:$0xff]
    %v103 = vld [vmem:[#allocation2 + $0x1c8] sm:$0xff]
    %v104 = vld [vmem:[#allocation2 + $0x1d0] sm:$0xff]
    %v105 = vld [vmem:[#allocation2 + $0x1d8] sm:$0xff]
    %v106 = vld [vmem:[#allocation2 + $0x1e0] sm:$0xff]
    %v107 = vld [vmem:[#allocation2 + $0x1e8] sm:$0xff]
    %v108 = vld [vmem:[#allocation2 + $0x1f0] sm:$0xff]
    %v109 = vld [vmem:[#allocation2 + $0x1f8] sm:$0xff]
    %v110 = vld [vmem:[#allocation2 + $0x200] sm:$0xff]
    %v111 = vld [vmem:[#allocation2 + $0x208] sm:$0xff]
    %v112 = vld [vmem:[#allocation2 + $0x210] sm:$0xff]
    %v113 = vld [vmem:[#allocation2 + $0x218] sm:$0xff]
    %v114 = vld [vmem:[#allocation2 + $0x220] sm:$0xff]
    %v115 = vld [vmem:[#allocation2 + $0x228] sm:$0xff]
    %v116 = vld [vmem:[#allocation2 + $0x230] sm:$0xff]
    %v117 = vld [vmem:[#allocation2 + $0x238] sm:$0xff]
    %v118 = vld [vmem:[#allocation2 + $0x240] sm:$0xff]
    %v119 = vld [vmem:[#allocation2 + $0x248] sm:$0xff]
    %v120 = vld [vmem:[#allocation2 + $0x250] sm:$0xff]
    %v121 = vld [vmem:[#allocation2 + $0x258] sm:$0xff]
    %v122 = vld [vmem:[#allocation2 + $0x260] sm:$0xff]
    %v123 = vld [vmem:[#allocation2 + $0x268] sm:$0xff]
    %v124 = vld [vmem:[#allocation2 + $0x270] sm:$0xff]
    %v125 = vld [vmem:[#allocation2 + $0x278] sm:$0xff]
    %v126 = vld [vmem:[#allocation2 + $0x280] sm:$0xff]
    %v127 = vld [vmem:[#allocation2 + $0x288] sm:$0xff]
    %v128 = vld [vmem:[#allocation2 + $0x290] sm:$0xff]
    %v129 = vld [vmem:[#allocation2 + $0x298] sm:$0xff]
    %v130 = vld [vmem:[#allocation2 + $0x2a0] sm:$0xff]
    %v131 = vld [vmem:[#allocation2 + $0x2a8] sm:$0xff]
    %v132 = vld [vmem:[#allocation2 + $0x2b0] sm:$0xff]
    %v133 = vld [vmem:[#allocation2 + $0x2b8] sm:$0xff]
    %v134 = vld [vmem:[#allocation2 + $0x2c0] sm:$0xff]
    %v135 = vld [vmem:[#allocation2 + $0x2c8] sm:$0xff]
    %v136 = vld [vmem:[#allocation2 + $0x2d0] sm:$0xff]
    %v137 = vld [vmem:[#allocation2 + $0x2d8] sm:$0xff]
    %v138 = vld [vmem:[#allocation2 + $0x2e0] sm:$0xff]
    %v139 = vld [vmem:[#allocation2 + $0x2e8] sm:$0xff]
    %v140 = vld [vmem:[#allocation2 + $0x2f0] sm:$0xff]
    %v141 = vld [vmem:[#allocation2 + $0x2f8] sm:$0xff]
    %v142 = vld [vmem:[#allocation2 + $0x300] sm:$0xff]
    %v143 = vld [vmem:[#allocation2 + $0x308] sm:$0xff]
    %v144 = vld [vmem:[#allocation2 + $0x310] sm:$0xff]
    %v145 = vld [vmem:[#allocation2 + $0x318] sm:$0xff]
    %v146 = vld [vmem:[#allocation2 + $0x320] sm:$0xff]
    %v147 = vld [vmem:[#allocation2 + $0x328] sm:$0xff]
    %v148 = vld [vmem:[#allocation2 + $0x330] sm:$0xff]
    %v149 = vld [vmem:[#allocation2 + $0x338] sm:$0xff]
    %v150 = vld [vmem:[#allocation2 + $0x340] sm:$0xff]
    %v151 = vld [vmem:[#allocation2 + $0x348] sm:$0xff]
    %v152 = vld [vmem:[#allocation2 + $0x350] sm:$0xff]
    %v153 = vld [vmem:[#allocation2 + $0x358] sm:$0xff]
    %v154 = vld [vmem:[#allocation2 + $0x360] sm:$0xff]
    %v155 = vld [vmem:[#allocation2 + $0x368] sm:$0xff]
    %v156 = vld [vmem:[#allocation2 + $0x370] sm:$0xff]
    %v157 = vld [vmem:[#allocation2 + $0x378] sm:$0xff]
    %v158 = vld [vmem:[%s2] sm:$0x3]
    %v160 = vlaneseq
    %v161 = vshrl.u32 %v160, 7
    %v162 = vsub.s32 0, %v161
    %v163 = vrot.slane %v158, %v162
    %v164 = vlaneseq
    %v165 = vshrl.u32 %v164, 7
    %v166 = vsub.s32 1, %v165
    %v167 = vrot.slane %v158, %v166
    %v174 = vunpack.c.l.b16 %v42
    %v175 = vunpack.c.h.b16 %v42
    %v176 = vunpack.c.l.b16 %v43
    %v177 = vunpack.c.h.b16 %v43
    %v178 = vunpack.c.l.b16 %v44
    %v179 = vunpack.c.h.b16 %v44
    %v180 = vunpack.c.l.b16 %v45
    %v181 = vpack.c.b16 %v174, %v174
    %v182 = vpack.c.b16 %v175, %v175
    %v183 = vpack.c.b16 %v176, %v176
    %v184 = vpack.c.b16 %v177, %v177
    %v185 = vpack.c.b16 %v178, %v178
    %v186 = vpack.c.b16 %v179, %v179
    %v187 = vpack.c.b16 %v180, %v180
    %v307 = vunpack.c.l.b16 %v46
    %v308 = vunpack.c.h.b16 %v46
    %v309 = vunpack.c.l.b16 %v47
    %v310 = vunpack.c.h.b16 %v47
    %v311 = vunpack.c.l.b16 %v48
    %v312 = vunpack.c.h.b16 %v48
    %v313 = vunpack.c.l.b16 %v49
    %v314 = vunpack.c.h.b16 %v49
    %v315 = vunpack.c.l.b16 %v50
    %v316 = vunpack.c.h.b16 %v50
    %v317 = vunpack.c.l.b16 %v51
    %v318 = vunpack.c.h.b16 %v51
    %v319 = vunpack.c.l.b16 %v52
    %v320 = vunpack.c.h.b16 %v52
    %v321 = vunpack.c.l.b16 %v53
    %v322 = vunpack.c.h.b16 %v53
    %v323 = vunpack.c.l.b16 %v54
    %v324 = vunpack.c.h.b16 %v54
    %v325 = vunpack.c.l.b16 %v55
    %v326 = vunpack.c.h.b16 %v55
    %v327 = vunpack.c.l.b16 %v56
    %v328 = vunpack.c.h.b16 %v56
    %v329 = vunpack.c.l.b16 %v57
    %v330 = vunpack.c.h.b16 %v57
    %v331 = vunpack.c.l.b16 %v58
    %v332 = vunpack.c.h.b16 %v58
    %v333 = vunpack.c.l.b16 %v59
    %v334 = vunpack.c.h.b16 %v59
    %v335 = vunpack.c.l.b16 %v60
    %v336 = vunpack.c.h.b16 %v60
    %v337 = vunpack.c.l.b16 %v61
    %v338 = vunpack.c.h.b16 %v61
    %v339 = vunpack.c.l.b16 %v62
    %v340 = vunpack.c.h.b16 %v62
    %v341 = vunpack.c.l.b16 %v63
    %v342 = vunpack.c.h.b16 %v63
    %v343 = vunpack.c.l.b16 %v64
    %v344 = vunpack.c.h.b16 %v64
    %v345 = vunpack.c.l.b16 %v65
    %v346 = vunpack.c.h.b16 %v65
    %v347 = vunpack.c.l.b16 %v66
    %v348 = vunpack.c.h.b16 %v66
    %v349 = vunpack.c.l.b16 %v67
    %v350 = vunpack.c.h.b16 %v67
    %v351 = vunpack.c.l.b16 %v68
    %v352 = vunpack.c.h.b16 %v68
    %v353 = vunpack.c.l.b16 %v69
    %v354 = vunpack.c.h.b16 %v69
    %v355 = vunpack.c.l.b16 %v70
    %v356 = vunpack.c.h.b16 %v70
    %v357 = vunpack.c.l.b16 %v71
    %v358 = vunpack.c.h.b16 %v71
    %v359 = vunpack.c.l.b16 %v72
    %v360 = vunpack.c.h.b16 %v72
    %v361 = vunpack.c.l.b16 %v73
    %v362 = vunpack.c.h.b16 %v73
    %v363 = vunpack.c.l.b16 %v74
    %v364 = vunpack.c.h.b16 %v74
    %v365 = vunpack.c.l.b16 %v75
    %v366 = vunpack.c.h.b16 %v75
    %v367 = vunpack.c.l.b16 %v76
    %v368 = vunpack.c.h.b16 %v76
    %v369 = vunpack.c.l.b16 %v77
    %v370 = vunpack.c.h.b16 %v77
    %v371 = vunpack.c.l.b16 %v78
    %v372 = vunpack.c.h.b16 %v78
    %v373 = vunpack.c.l.b16 %v79
    %v374 = vunpack.c.h.b16 %v79
    %v375 = vunpack.c.l.b16 %v80
    %v376 = vunpack.c.h.b16 %v80
    %v377 = vunpack.c.l.b16 %v81
    %v378 = vunpack.c.h.b16 %v81
    %v379 = vunpack.c.l.b16 %v82
    %v380 = vunpack.c.h.b16 %v82
    %v381 = vunpack.c.l.b16 %v83
    %v382 = vunpack.c.h.b16 %v83
    %v383 = vunpack.c.l.b16 %v84
    %v384 = vunpack.c.h.b16 %v84
    %v385 = vunpack.c.l.b16 %v85
    %v386 = vunpack.c.h.b16 %v85
    %v387 = vunpack.c.l.b16 %v86
    %v388 = vunpack.c.h.b16 %v86
    %v389 = vunpack.c.l.b16 %v87
    %v390 = vunpack.c.h.b16 %v87
    %v391 = vunpack.c.l.b16 %v88
    %v392 = vunpack.c.h.b16 %v88
    %v393 = vunpack.c.l.b16 %v89
    %v394 = vunpack.c.h.b16 %v89
    %v395 = vunpack.c.l.b16 %v90
    %v396 = vunpack.c.h.b16 %v90
    %v397 = vunpack.c.l.b16 %v91
    %v398 = vunpack.c.h.b16 %v91
    %v399 = vunpack.c.l.b16 %v92
    %v400 = vunpack.c.h.b16 %v92
    %v401 = vunpack.c.l.b16 %v93
    %v402 = vunpack.c.h.b16 %v93
    %v403 = vunpack.c.l.b16 %v94
    %v404 = vunpack.c.h.b16 %v94
    %v405 = vunpack.c.l.b16 %v95
    %v406 = vunpack.c.h.b16 %v95
    %v407 = vunpack.c.l.b16 %v96
    %v408 = vunpack.c.h.b16 %v96
    %v409 = vunpack.c.l.b16 %v97
    %v410 = vunpack.c.h.b16 %v97
    %v411 = vunpack.c.l.b16 %v98
    %v412 = vunpack.c.h.b16 %v98
    %v413 = vunpack.c.l.b16 %v99
    %v414 = vunpack.c.h.b16 %v99
    %v415 = vunpack.c.l.b16 %v100
    %v416 = vunpack.c.h.b16 %v100
    %v417 = vunpack.c.l.b16 %v101
    %v418 = vunpack.c.h.b16 %v101
    %v419 = vunpack.c.l.b16 %v102
    %v420 = vunpack.c.h.b16 %v102
    %v421 = vunpack.c.l.b16 %v103
    %v422 = vunpack.c.h.b16 %v103
    %v423 = vunpack.c.l.b16 %v104
    %v424 = vunpack.c.h.b16 %v104
    %v425 = vunpack.c.l.b16 %v105
    %v426 = vunpack.c.h.b16 %v105
    %v427 = vunpack.c.l.b16 %v106
    %v428 = vunpack.c.h.b16 %v106
    %v429 = vunpack.c.l.b16 %v107
    %v430 = vunpack.c.h.b16 %v107
    %v431 = vunpack.c.l.b16 %v108
    %v432 = vunpack.c.h.b16 %v108
    %v433 = vunpack.c.l.b16 %v109
    %v434 = vunpack.c.h.b16 %v109
    %v435 = vunpack.c.l.b16 %v110
    %v436 = vunpack.c.h.b16 %v110
    %v437 = vunpack.c.l.b16 %v111
    %v438 = vunpack.c.h.b16 %v111
    %v439 = vunpack.c.l.b16 %v112
    %v440 = vunpack.c.h.b16 %v112
    %v441 = vunpack.c.l.b16 %v113
    %v442 = vunpack.c.h.b16 %v113
    %v443 = vunpack.c.l.b16 %v114
    %v444 = vunpack.c.h.b16 %v114
    %v445 = vunpack.c.l.b16 %v115
    %v446 = vunpack.c.h.b16 %v115
    %v447 = vunpack.c.l.b16 %v116
    %v448 = vunpack.c.h.b16 %v116
    %v449 = vunpack.c.l.b16 %v117
    %v450 = vunpack.c.h.b16 %v117
    %v451 = vunpack.c.l.b16 %v118
    %v452 = vunpack.c.h.b16 %v118
    %v453 = vunpack.c.l.b16 %v119
    %v454 = vunpack.c.h.b16 %v119
    %v455 = vunpack.c.l.b16 %v120
    %v456 = vunpack.c.h.b16 %v120
    %v457 = vunpack.c.l.b16 %v121
    %v458 = vunpack.c.h.b16 %v121
    %v459 = vunpack.c.l.b16 %v122
    %v460 = vunpack.c.h.b16 %v122
    %v461 = vunpack.c.l.b16 %v123
    %v462 = vunpack.c.h.b16 %v123
    %v463 = vunpack.c.l.b16 %v124
    %v464 = vunpack.c.h.b16 %v124
    %v465 = vunpack.c.l.b16 %v125
    %v466 = vunpack.c.h.b16 %v125
    %v467 = vunpack.c.l.b16 %v126
    %v468 = vunpack.c.h.b16 %v126
    %v469 = vunpack.c.l.b16 %v127
    %v470 = vunpack.c.h.b16 %v127
    %v471 = vunpack.c.l.b16 %v128
    %v472 = vunpack.c.h.b16 %v128
    %v473 = vunpack.c.l.b16 %v129
    %v474 = vunpack.c.h.b16 %v129
    %v475 = vunpack.c.l.b16 %v130
    %v476 = vunpack.c.h.b16 %v130
    %v477 = vunpack.c.l.b16 %v131
    %v478 = vunpack.c.h.b16 %v131
    %v479 = vunpack.c.l.b16 %v132
    %v480 = vunpack.c.h.b16 %v132
    %v481 = vunpack.c.l.b16 %v133
    %v482 = vunpack.c.h.b16 %v133
    %v483 = vunpack.c.l.b16 %v134
    %v484 = vunpack.c.h.b16 %v134
    %v485 = vunpack.c.l.b16 %v135
    %v486 = vunpack.c.h.b16 %v135
    %v487 = vunpack.c.l.b16 %v136
    %v488 = vunpack.c.h.b16 %v136
    %v489 = vunpack.c.l.b16 %v137
    %v490 = vunpack.c.h.b16 %v137
    %v491 = vunpack.c.l.b16 %v138
    %v492 = vunpack.c.h.b16 %v138
    %v493 = vunpack.c.l.b16 %v139
    %v494 = vunpack.c.h.b16 %v139
    %v495 = vunpack.c.l.b16 %v140
    %v496 = vunpack.c.h.b16 %v140
    %v497 = vunpack.c.l.b16 %v141
    %v498 = vunpack.c.h.b16 %v141
    %v499 = vunpack.c.l.b16 %v142
    %v500 = vunpack.c.h.b16 %v142
    %v501 = vunpack.c.l.b16 %v143
    %v502 = vunpack.c.h.b16 %v143
    %v503 = vunpack.c.l.b16 %v144
    %v504 = vunpack.c.h.b16 %v144
    %v505 = vunpack.c.l.b16 %v145
    %v506 = vunpack.c.h.b16 %v145
    %v507 = vunpack.c.l.b16 %v146
    %v508 = vunpack.c.h.b16 %v146
    %v509 = vunpack.c.l.b16 %v147
    %v510 = vunpack.c.h.b16 %v147
    %v511 = vunpack.c.l.b16 %v148
    %v512 = vunpack.c.h.b16 %v148
    %v513 = vunpack.c.l.b16 %v149
    %v514 = vunpack.c.h.b16 %v149
    %v515 = vunpack.c.l.b16 %v150
    %v516 = vunpack.c.h.b16 %v150
    %v517 = vunpack.c.l.b16 %v151
    %v518 = vunpack.c.h.b16 %v151
    %v519 = vunpack.c.l.b16 %v152
    %v520 = vunpack.c.h.b16 %v152
    %v521 = vunpack.c.l.b16 %v153
    %v522 = vunpack.c.h.b16 %v153
    %v523 = vunpack.c.l.b16 %v154
    %v524 = vunpack.c.h.b16 %v154
    %v525 = vunpack.c.l.b16 %v155
    %v526 = vunpack.c.h.b16 %v155
    %v527 = vunpack.c.l.b16 %v156
    %v528 = vunpack.c.h.b16 %v156
    %v529 = vunpack.c.l.b16 %v157
    %v530 = vunpack.c.h.b16 %v157
    %v531 = vpack.c.b16 %v309, %v307
    %v532 = vpack.c.b16 %v310, %v308
    %v533 = vpack.c.b16 %v313, %v311
    %v534 = vpack.c.b16 %v314, %v312
    %v535 = vpack.c.b16 %v317, %v315
    %v536 = vpack.c.b16 %v318, %v316
    %v537 = vpack.c.b16 %v321, %v319
    %v538 = vpack.c.b16 %v322, %v320
    %v539 = vpack.c.b16 %v325, %v323
    %v540 = vpack.c.b16 %v326, %v324
    %v541 = vpack.c.b16 %v329, %v327
    %v542 = vpack.c.b16 %v330, %v328
    %v543 = vpack.c.b16 %v333, %v331
    %v544 = vpack.c.b16 %v334, %v332
    %v545 = vpack.c.b16 %v337, %v335
    %v546 = vpack.c.b16 %v338, %v336
    %v547 = vpack.c.b16 %v341, %v339
    %v548 = vpack.c.b16 %v342, %v340
    %v549 = vpack.c.b16 %v345, %v343
    %v550 = vpack.c.b16 %v346, %v344
    %v551 = vpack.c.b16 %v349, %v347
    %v552 = vpack.c.b16 %v350, %v348
    %v553 = vpack.c.b16 %v353, %v351
    %v554 = vpack.c.b16 %v354, %v352
    %v555 = vpack.c.b16 %v357, %v355
    %v556 = vpack.c.b16 %v358, %v356
    %v557 = vpack.c.b16 %v361, %v359
    %v558 = vpack.c.b16 %v362, %v360
    %v559 = vpack.c.b16 %v365, %v363
    %v560 = vpack.c.b16 %v366, %v364
    %v561 = vpack.c.b16 %v369, %v367
    %v562 = vpack.c.b16 %v370, %v368
    %v563 = vpack.c.b16 %v373, %v371
    %v564 = vpack.c.b16 %v374, %v372
    %v565 = vpack.c.b16 %v377, %v375
    %v566 = vpack.c.b16 %v378, %v376
    %v567 = vpack.c.b16 %v381, %v379
    %v568 = vpack.c.b16 %v382, %v380
    %v569 = vpack.c.b16 %v385, %v383
    %v570 = vpack.c.b16 %v386, %v384
    %v571 = vpack.c.b16 %v389, %v387
    %v572 = vpack.c.b16 %v390, %v388
    %v573 = vpack.c.b16 %v393, %v391
    %v574 = vpack.c.b16 %v394, %v392
    %v575 = vpack.c.b16 %v397, %v395
    %v576 = vpack.c.b16 %v398, %v396
    %v577 = vpack.c.b16 %v401, %v399
    %v578 = vpack.c.b16 %v402, %v400
    %v579 = vpack.c.b16 %v405, %v403
    %v580 = vpack.c.b16 %v406, %v404
    %v581 = vpack.c.b16 %v409, %v407
    %v582 = vpack.c.b16 %v410, %v408
    %v583 = vpack.c.b16 %v413, %v411
    %v584 = vpack.c.b16 %v414, %v412
    %v585 = vpack.c.b16 %v417, %v415
    %v586 = vpack.c.b16 %v418, %v416
    %v587 = vpack.c.b16 %v421, %v419
    %v588 = vpack.c.b16 %v422, %v420
    %v589 = vpack.c.b16 %v425, %v423
    %v590 = vpack.c.b16 %v426, %v424
    %v591 = vpack.c.b16 %v429, %v427
    %v592 = vpack.c.b16 %v430, %v428
    %v593 = vpack.c.b16 %v433, %v431
    %v594 = vpack.c.b16 %v434, %v432
    %v595 = vpack.c.b16 %v437, %v435
    %v596 = vpack.c.b16 %v438, %v436
    %v597 = vpack.c.b16 %v441, %v439
    %v598 = vpack.c.b16 %v442, %v440
    %v599 = vpack.c.b16 %v445, %v443
    %v600 = vpack.c.b16 %v446, %v444
    %v601 = vpack.c.b16 %v449, %v447
    %v602 = vpack.c.b16 %v450, %v448
    %v603 = vpack.c.b16 %v453, %v451
    %v604 = vpack.c.b16 %v454, %v452
    %v605 = vpack.c.b16 %v457, %v455
    %v606 = vpack.c.b16 %v458, %v456
    %v607 = vpack.c.b16 %v461, %v459
    %v608 = vpack.c.b16 %v462, %v460
    %v609 = vpack.c.b16 %v465, %v463
    %v610 = vpack.c.b16 %v466, %v464
    %v611 = vpack.c.b16 %v469, %v467
    %v612 = vpack.c.b16 %v470, %v468
    %v613 = vpack.c.b16 %v473, %v471
    %v614 = vpack.c.b16 %v474, %v472
    %v615 = vpack.c.b16 %v477, %v475
    %v616 = vpack.c.b16 %v478, %v476
    %v617 = vpack.c.b16 %v481, %v479
    %v618 = vpack.c.b16 %v482, %v480
    %v619 = vpack.c.b16 %v485, %v483
    %v620 = vpack.c.b16 %v486, %v484
    %v621 = vpack.c.b16 %v489, %v487
    %v622 = vpack.c.b16 %v490, %v488
    %v623 = vpack.c.b16 %v493, %v491
    %v624 = vpack.c.b16 %v494, %v492
    %v625 = vpack.c.b16 %v497, %v495
    %v626 = vpack.c.b16 %v498, %v496
    %v627 = vpack.c.b16 %v501, %v499
    %v628 = vpack.c.b16 %v502, %v500
    %v629 = vpack.c.b16 %v505, %v503
    %v630 = vpack.c.b16 %v506, %v504
    %v631 = vpack.c.b16 %v509, %v507
    %v632 = vpack.c.b16 %v510, %v508
    %v633 = vpack.c.b16 %v513, %v511
    %v634 = vpack.c.b16 %v514, %v512
    %v635 = vpack.c.b16 %v517, %v515
    %v636 = vpack.c.b16 %v518, %v516
    %v637 = vpack.c.b16 %v521, %v519
    %v638 = vpack.c.b16 %v522, %v520
    %v639 = vpack.c.b16 %v525, %v523
    %v640 = vpack.c.b16 %v526, %v524
    %v641 = vpack.c.b16 %v529, %v527
    %v642 = vpack.c.b16 %v530, %v528
    %755 = vmatprep.subr.bf16.mxu0 %v532
    %756 = vmatpush1.bf16.msra.mxu0 %v531
    %757 = vmatprep.subr.bf16.mxu0 %v534
    %758 = vmatpush1.bf16.msra.mxu0 %v533
    %759 = vmatprep.subr.bf16.mxu0 %v536
    %760 = vmatpush1.bf16.msra.mxu0 %v535
    %761 = vmatprep.subr.bf16.mxu0 %v538
    %762 = vmatpush1.bf16.msra.mxu0 %v537
    %763 = vmatprep.subr.bf16.mxu0 %v540
    %764 = vmatpush1.bf16.msra.mxu0 %v539
    %765 = vmatprep.subr.bf16.mxu0 %v542
    %766 = vmatpush1.bf16.msra.mxu0 %v541
    %767 = vmatprep.subr.bf16.mxu0 %v544
    %768 = vmatpush1.bf16.msra.mxu0 %v543
    %769 = vmatprep.subr.bf16.mxu0 %v546
    %770 = vmatpush1.bf16.msra.mxu0 %v545
    %771 = vmatprep.subr.bf16.mxu0 %v548
    %772 = vmatpush1.bf16.msra.mxu0 %v547
    %773 = vmatprep.subr.bf16.mxu0 %v550
    %774 = vmatpush1.bf16.msra.mxu0 %v549
    %775 = vmatprep.subr.bf16.mxu0 %v552
    %776 = vmatpush1.bf16.msra.mxu0 %v551
    %777 = vmatprep.subr.bf16.mxu0 %v554
    %778 = vmatpush1.bf16.msra.mxu0 %v553
    %779 = vmatprep.subr.bf16.mxu0 %v556
    %780 = vmatpush1.bf16.msra.mxu0 %v555
    %781 = vmatprep.subr.bf16.mxu0 %v558
    %782 = vmatpush1.bf16.msra.mxu0 %v557
    %783 = vmatprep.subr.bf16.mxu0 %v560
    %784 = vmatpush1.bf16.msra.mxu0 %v559
    %785 = vmatprep.subr.bf16.mxu0 %v562
    %786 = vmatpush1.bf16.msra.mxu0 %v561
    %787 = vmatprep.mubr.bf16.mxu0 %v182
    %788 = vmatmul.mubr.bf16.gmra.mrb[0].mxu0 %v181
    %v789 = vpop.f32.mrb[0].mxu0
    %v790 = vadd.f32 %v163, %v789
    %v791 = vpop.f32.mrb[0].mxu0
    %v792 = vadd.f32 %v167, %v791
    %v793 = vpop.f32.mrb[0].mxu0
    %v794 = vpop.f32.mrb[0].mxu0
    %795 = vdwg.mxu0
    %796 = vmatprep.subr.bf16.mxu0 %v564
    %797 = vmatpush1.bf16.msra.mxu0 %v563
    %798 = vmatprep.subr.bf16.mxu0 %v566
    %799 = vmatpush1.bf16.msra.mxu0 %v565
    %800 = vmatprep.subr.bf16.mxu0 %v568
    %801 = vmatpush1.bf16.msra.mxu0 %v567
    %802 = vmatprep.subr.bf16.mxu0 %v570
    %803 = vmatpush1.bf16.msra.mxu0 %v569
    %804 = vmatprep.subr.bf16.mxu0 %v572
    %805 = vmatpush1.bf16.msra.mxu0 %v571
    %806 = vmatprep.subr.bf16.mxu0 %v574
    %807 = vmatpush1.bf16.msra.mxu0 %v573
    %808 = vmatprep.subr.bf16.mxu0 %v576
    %809 = vmatpush1.bf16.msra.mxu0 %v575
    %810 = vmatprep.subr.bf16.mxu0 %v578
    %811 = vmatpush1.bf16.msra.mxu0 %v577
    %812 = vmatprep.subr.bf16.mxu0 %v580
    %813 = vmatpush1.bf16.msra.mxu0 %v579
    %814 = vmatprep.subr.bf16.mxu0 %v582
    %815 = vmatpush1.bf16.msra.mxu0 %v581
    %816 = vmatprep.subr.bf16.mxu0 %v584
    %817 = vmatpush1.bf16.msra.mxu0 %v583
    %818 = vmatprep.subr.bf16.mxu0 %v586
    %819 = vmatpush1.bf16.msra.mxu0 %v585
    %820 = vmatprep.subr.bf16.mxu0 %v588
    %821 = vmatpush1.bf16.msra.mxu0 %v587
    %822 = vmatprep.subr.bf16.mxu0 %v590
    %823 = vmatpush1.bf16.msra.mxu0 %v589
    %824 = vmatprep.subr.bf16.mxu0 %v592
    %825 = vmatpush1.bf16.msra.mxu0 %v591
    %826 = vmatprep.subr.bf16.mxu0 %v594
    %827 = vmatpush1.bf16.msra.mxu0 %v593
    %828 = vmatprep.mubr.bf16.mxu0 %v184
    %829 = vmatmul.mubr.bf16.gmra.mrb[0].mxu0 %v183
    %v830 = vpop.f32.mrb[0].mxu0
    %v831 = vadd.f32 %v790, %v830
    %v832 = vpop.f32.mrb[0].mxu0
    %v833 = vadd.f32 %v792, %v832
    %v834 = vpop.f32.mrb[0].mxu0
    %v835 = vpop.f32.mrb[0].mxu0
    %836 = vdwg.mxu0
    %837 = vmatprep.subr.bf16.mxu0 %v596
    %838 = vmatpush1.bf16.msra.mxu0 %v595
    %839 = vmatprep.subr.bf16.mxu0 %v598
    %840 = vmatpush1.bf16.msra.mxu0 %v597
    %841 = vmatprep.subr.bf16.mxu0 %v600
    %842 = vmatpush1.bf16.msra.mxu0 %v599
    %843 = vmatprep.subr.bf16.mxu0 %v602
    %844 = vmatpush1.bf16.msra.mxu0 %v601
    %845 = vmatprep.subr.bf16.mxu0 %v604
    %846 = vmatpush1.bf16.msra.mxu0 %v603
    %847 = vmatprep.subr.bf16.mxu0 %v606
    %848 = vmatpush1.bf16.msra.mxu0 %v605
    %849 = vmatprep.subr.bf16.mxu0 %v608
    %850 = vmatpush1.bf16.msra.mxu0 %v607
    %851 = vmatprep.subr.bf16.mxu0 %v610
    %852 = vmatpush1.bf16.msra.mxu0 %v609
    %853 = vmatprep.subr.bf16.mxu0 %v612
    %854 = vmatpush1.bf16.msra.mxu0 %v611
    %855 = vmatprep.subr.bf16.mxu0 %v614
    %856 = vmatpush1.bf16.msra.mxu0 %v613
    %857 = vmatprep.subr.bf16.mxu0 %v616
    %858 = vmatpush1.bf16.msra.mxu0 %v615
    %859 = vmatprep.subr.bf16.mxu0 %v618
    %860 = vmatpush1.bf16.msra.mxu0 %v617
    %861 = vmatprep.subr.bf16.mxu0 %v620
    %862 = vmatpush1.bf16.msra.mxu0 %v619
    %863 = vmatprep.subr.bf16.mxu0 %v622
    %864 = vmatpush1.bf16.msra.mxu0 %v621
    %865 = vmatprep.subr.bf16.mxu0 %v624
    %866 = vmatpush1.bf16.msra.mxu0 %v623
    %867 = vmatprep.subr.bf16.mxu0 %v626
    %868 = vmatpush1.bf16.msra.mxu0 %v625
    %869 = vmatprep.mubr.bf16.mxu0 %v186
    %870 = vmatmul.mubr.bf16.gmra.mrb[0].mxu0 %v185
    %v871 = vpop.f32.mrb[0].mxu0
    %v872 = vadd.f32 %v831, %v871
    %v873 = vpop.f32.mrb[0].mxu0
    %v874 = vadd.f32 %v833, %v873
    %v875 = vpop.f32.mrb[0].mxu0
    %v876 = vpop.f32.mrb[0].mxu0
    %877 = vdwg.mxu0
    %878 = vmatprep.subr.bf16.mxu0 %v628
    %879 = vmatpush1.bf16.msra.mxu0 %v627
    %880 = vmatprep.subr.bf16.mxu0 %v630
    %881 = vmatpush1.bf16.msra.mxu0 %v629
    %882 = vmatprep.subr.bf16.mxu0 %v632
    %883 = vmatpush1.bf16.msra.mxu0 %v631
    %884 = vmatprep.subr.bf16.mxu0 %v634
    %885 = vmatpush1.bf16.msra.mxu0 %v633
    %886 = vmatprep.subr.bf16.mxu0 %v636
    %887 = vmatpush1.bf16.msra.mxu0 %v635
    %888 = vmatprep.subr.bf16.mxu0 %v638
    %889 = vmatpush1.bf16.msra.mxu0 %v637
    %890 = vmatprep.subr.bf16.mxu0 %v640
    %891 = vmatpush1.bf16.msra.mxu0 %v639
    %892 = vmatprep.subr.bf16.mxu0 %v642
    %893 = vmatpush1.bf16.msra.mxu0 %v641
    %894 = vmatprep.subr.bf16.mxu0 0
    %895 = vmatpush1.bf16.msra.mxu0 0
    %896 = vmatprep.subr.bf16.mxu0 0
    %897 = vmatpush1.bf16.msra.mxu0 0
    %898 = vmatprep.subr.bf16.mxu0 0
    %899 = vmatpush1.bf16.msra.mxu0 0
    %900 = vmatprep.subr.bf16.mxu0 0
    %901 = vmatpush1.bf16.msra.mxu0 0
    %902 = vmatprep.subr.bf16.mxu0 0
    %903 = vmatpush1.bf16.msra.mxu0 0
    %904 = vmatprep.subr.bf16.mxu0 0
    %905 = vmatpush1.bf16.msra.mxu0 0
    %906 = vmatprep.subr.bf16.mxu0 0
    %907 = vmatpush1.bf16.msra.mxu0 0
    %908 = vmatprep.subr.bf16.mxu0 0
    %909 = vmatpush1.bf16.msra.mxu0 0
    %910 = vmatprep.mubr.bf16.mxu0 0
    %911 = vmatmul.mubr.bf16.gmra.mrb[0].mxu0 %v187
    %v912 = vpop.f32.mrb[0].mxu0
    %v913 = vadd.f32 %v872, %v912
    %v914 = vpop.f32.mrb[0].mxu0
    %v915 = vadd.f32 %v874, %v914
    %v916 = vpop.f32.mrb[0].mxu0
    %v917 = vpop.f32.mrb[0].mxu0
    %918 = vdwg.mxu0
    %v919 = vmax.f32 %v913, 0.0
    %v920 = vmax.f32 %v915, 0.0
    %v921 = vpack.c.bf16 %v919, %v919
    %v922 = vpack.c.bf16 %v920, %v920
    %v923 = vld [vmem:[%s3] sm:$0xff]
    %v924 = vld [vmem:[%s3 + $0x8] sm:$0xff]
    %v925 = vld [vmem:[%s3 + $0x10] sm:$0xff]
    %v926 = vld [vmem:[%s3 + $0x18] sm:$0xff]
    %v927 = vld [vmem:[%s3 + $0x20] sm:$0xff]
    %v928 = vld [vmem:[%s3 + $0x28] sm:$0xff]
    %v929 = vld [vmem:[%s3 + $0x30] sm:$0xff]
    %v930 = vld [vmem:[%s3 + $0x38] sm:$0xff]
    %v931 = vld [vmem:[%s3 + $0x40] sm:$0xff]
    %v932 = vld [vmem:[%s3 + $0x48] sm:$0xff]
    %v933 = vld [vmem:[%s3 + $0x50] sm:$0xff]
    %v934 = vld [vmem:[%s3 + $0x58] sm:$0xff]
    %v935 = vld [vmem:[%s3 + $0x60] sm:$0xff]
    %v936 = vld [vmem:[%s3 + $0x68] sm:$0xff]
    %v937 = vld [vmem:[%s3 + $0x70] sm:$0xff]
    %v938 = vld [vmem:[%s3 + $0x78] sm:$0xff]
    %v939 = vld [vmem:[%s3 + $0x80] sm:$0xff]
    %v940 = vld [vmem:[%s3 + $0x88] sm:$0xff]
    %v941 = vld [vmem:[%s3 + $0x90] sm:$0xff]
    %v942 = vld [vmem:[%s3 + $0x98] sm:$0xff]
    %v943 = vld [vmem:[%s3 + $0xa0] sm:$0xff]
    %v944 = vld [vmem:[%s3 + $0xa8] sm:$0xff]
    %v945 = vld [vmem:[%s3 + $0xb0] sm:$0xff]
    %v946 = vld [vmem:[%s3 + $0xb8] sm:$0xff]
    %v947 = vld [vmem:[%s3 + $0xc0] sm:$0xff]
    %v948 = vld [vmem:[%s3 + $0xc8] sm:$0xff]
    %v949 = vld [vmem:[%s3 + $0xd0] sm:$0xff]
    %v950 = vld [vmem:[%s3 + $0xd8] sm:$0xff]
    %v951 = vld [vmem:[%s3 + $0xe0] sm:$0xff]
    %v952 = vld [vmem:[%s3 + $0xe8] sm:$0xff]
    %v953 = vld [vmem:[%s3 + $0xf0] sm:$0xff]
    %v954 = vld [vmem:[%s3 + $0xf8] sm:$0xff]
    %v955 = vld [vmem:[%s4] sm:$0x3]
    %v957 = vlaneseq
    %v958 = vshrl.u32 %v957, 7
    %v959 = vsub.s32 0, %v958
    %v960 = vrot.slane %v955, %v959
    %v961 = vlaneseq
    %v962 = vshrl.u32 %v961, 7
    %v963 = vsub.s32 1, %v962
    %v964 = vrot.slane %v955, %v963
    %v999 = vunpack.c.l.b16 %v923
    %v1000 = vunpack.c.h.b16 %v923
    %v1001 = vunpack.c.l.b16 %v924
    %v1002 = vunpack.c.h.b16 %v924
    %v1003 = vunpack.c.l.b16 %v925
    %v1004 = vunpack.c.h.b16 %v925
    %v1005 = vunpack.c.l.b16 %v926
    %v1006 = vunpack.c.h.b16 %v926
    %v1007 = vunpack.c.l.b16 %v927
    %v1008 = vunpack.c.h.b16 %v927
    %v1009 = vunpack.c.l.b16 %v928
    %v1010 = vunpack.c.h.b16 %v928
    %v1011 = vunpack.c.l.b16 %v929
    %v1012 = vunpack.c.h.b16 %v929
    %v1013 = vunpack.c.l.b16 %v930
    %v1014 = vunpack.c.h.b16 %v930
    %v1015 = vunpack.c.l.b16 %v931
    %v1016 = vunpack.c.h.b16 %v931
    %v1017 = vunpack.c.l.b16 %v932
    %v1018 = vunpack.c.h.b16 %v932
    %v1019 = vunpack.c.l.b16 %v933
    %v1020 = vunpack.c.h.b16 %v933
    %v1021 = vunpack.c.l.b16 %v934
    %v1022 = vunpack.c.h.b16 %v934
    %v1023 = vunpack.c.l.b16 %v935
    %v1024 = vunpack.c.h.b16 %v935
    %v1025 = vunpack.c.l.b16 %v936
    %v1026 = vunpack.c.h.b16 %v936
    %v1027 = vunpack.c.l.b16 %v937
    %v1028 = vunpack.c.h.b16 %v937
    %v1029 = vunpack.c.l.b16 %v938
    %v1030 = vunpack.c.h.b16 %v938
    %v1031 = vunpack.c.l.b16 %v939
    %v1032 = vunpack.c.h.b16 %v939
    %v1033 = vunpack.c.l.b16 %v940
    %v1034 = vunpack.c.h.b16 %v940
    %v1035 = vunpack.c.l.b16 %v941
    %v1036 = vunpack.c.h.b16 %v941
    %v1037 = vunpack.c.l.b16 %v942
    %v1038 = vunpack.c.h.b16 %v942
    %v1039 = vunpack.c.l.b16 %v943
    %v1040 = vunpack.c.h.b16 %v943
    %v1041 = vunpack.c.l.b16 %v944
    %v1042 = vunpack.c.h.b16 %v944
    %v1043 = vunpack.c.l.b16 %v945
    %v1044 = vunpack.c.h.b16 %v945
    %v1045 = vunpack.c.l.b16 %v946
    %v1046 = vunpack.c.h.b16 %v946
    %v1047 = vunpack.c.l.b16 %v947
    %v1048 = vunpack.c.h.b16 %v947
    %v1049 = vunpack.c.l.b16 %v948
    %v1050 = vunpack.c.h.b16 %v948
    %v1051 = vunpack.c.l.b16 %v949
    %v1052 = vunpack.c.h.b16 %v949
    %v1053 = vunpack.c.l.b16 %v950
    %v1054 = vunpack.c.h.b16 %v950
    %v1055 = vunpack.c.l.b16 %v951
    %v1056 = vunpack.c.h.b16 %v951
    %v1057 = vunpack.c.l.b16 %v952
    %v1058 = vunpack.c.h.b16 %v952
    %v1059 = vunpack.c.l.b16 %v953
    %v1060 = vunpack.c.h.b16 %v953
    %v1061 = vunpack.c.l.b16 %v954
    %v1062 = vunpack.c.h.b16 %v954
    %v1063 = vpack.c.b16 %v1001, %v999
    %v1064 = vpack.c.b16 %v1002, %v1000
    %v1065 = vpack.c.b16 %v1005, %v1003
    %v1066 = vpack.c.b16 %v1006, %v1004
    %v1067 = vpack.c.b16 %v1009, %v1007
    %v1068 = vpack.c.b16 %v1010, %v1008
    %v1069 = vpack.c.b16 %v1013, %v1011
    %v1070 = vpack.c.b16 %v1014, %v1012
    %v1071 = vpack.c.b16 %v1017, %v1015
    %v1072 = vpack.c.b16 %v1018, %v1016
    %v1073 = vpack.c.b16 %v1021, %v1019
    %v1074 = vpack.c.b16 %v1022, %v1020
    %v1075 = vpack.c.b16 %v1025, %v1023
    %v1076 = vpack.c.b16 %v1026, %v1024
    %v1077 = vpack.c.b16 %v1029, %v1027
    %v1078 = vpack.c.b16 %v1030, %v1028
    %v1079 = vpack.c.b16 %v1033, %v1031
    %v1080 = vpack.c.b16 %v1034, %v1032
    %v1081 = vpack.c.b16 %v1037, %v1035
    %v1082 = vpack.c.b16 %v1038, %v1036
    %v1083 = vpack.c.b16 %v1041, %v1039
    %v1084 = vpack.c.b16 %v1042, %v1040
    %v1085 = vpack.c.b16 %v1045, %v1043
    %v1086 = vpack.c.b16 %v1046, %v1044
    %v1087 = vpack.c.b16 %v1049, %v1047
    %v1088 = vpack.c.b16 %v1050, %v1048
    %v1089 = vpack.c.b16 %v1053, %v1051
    %v1090 = vpack.c.b16 %v1054, %v1052
    %v1091 = vpack.c.b16 %v1057, %v1055
    %v1092 = vpack.c.b16 %v1058, %v1056
    %v1093 = vpack.c.b16 %v1061, %v1059
    %v1094 = vpack.c.b16 %v1062, %v1060
    %1127 = vmatprep.subr.bf16.mxu0 %v1064
    %1128 = vmatpush1.bf16.msra.mxu0 %v1063
    %1129 = vmatprep.subr.bf16.mxu0 %v1066
    %1130 = vmatpush1.bf16.msra.mxu0 %v1065
    %1131 = vmatprep.subr.bf16.mxu0 %v1068
    %1132 = vmatpush1.bf16.msra.mxu0 %v1067
    %1133 = vmatprep.subr.bf16.mxu0 %v1070
    %1134 = vmatpush1.bf16.msra.mxu0 %v1069
    %1135 = vmatprep.subr.bf16.mxu0 %v1072
    %1136 = vmatpush1.bf16.msra.mxu0 %v1071
    %1137 = vmatprep.subr.bf16.mxu0 %v1074
    %1138 = vmatpush1.bf16.msra.mxu0 %v1073
    %1139 = vmatprep.subr.bf16.mxu0 %v1076
    %1140 = vmatpush1.bf16.msra.mxu0 %v1075
    %1141 = vmatprep.subr.bf16.mxu0 %v1078
    %1142 = vmatpush1.bf16.msra.mxu0 %v1077
    %1143 = vmatprep.subr.bf16.mxu0 %v1080
    %1144 = vmatpush1.bf16.msra.mxu0 %v1079
    %1145 = vmatprep.subr.bf16.mxu0 %v1082
    %1146 = vmatpush1.bf16.msra.mxu0 %v1081
    %1147 = vmatprep.subr.bf16.mxu0 %v1084
    %1148 = vmatpush1.bf16.msra.mxu0 %v1083
    %1149 = vmatprep.subr.bf16.mxu0 %v1086
    %1150 = vmatpush1.bf16.msra.mxu0 %v1085
    %1151 = vmatprep.subr.bf16.mxu0 %v1088
    %1152 = vmatpush1.bf16.msra.mxu0 %v1087
    %1153 = vmatprep.subr.bf16.mxu0 %v1090
    %1154 = vmatpush1.bf16.msra.mxu0 %v1089
    %1155 = vmatprep.subr.bf16.mxu0 %v1092
    %1156 = vmatpush1.bf16.msra.mxu0 %v1091
    %1157 = vmatprep.subr.bf16.mxu0 %v1094
    %1158 = vmatpush1.bf16.msra.mxu0 %v1093
    %1159 = vmatprep.mubr.bf16.mxu0 %v922
    %1160 = vmatmul.mubr.bf16.gmra.mrb[0].mxu0 %v921
    %v1161 = vpop.f32.mrb[0].mxu0
    %v1162 = vadd.f32 %v960, %v1161
    %v1163 = vpop.f32.mrb[0].mxu0
    %v1164 = vadd.f32 %v964, %v1163
    %v1165 = vpop.f32.mrb[0].mxu0
    %v1166 = vpop.f32.mrb[0].mxu0
    %1167 = vdwg.mxu0
    %v1168 = vmax.f32 %v1162, 0.0
    %v1169 = vmax.f32 %v1164, 0.0
    %v1170 = vpack.c.bf16 %v1168, %v1168
    %v1171 = vpack.c.bf16 %v1169, %v1169
    %v1172 = vld [vmem:[%s5] sm:$0xf]
    %v1173 = vld [vmem:[%s5 + $0x4] sm:$0xf]
    %v1174 = vld [vmem:[%s5 + $0x8] sm:$0xf]
    %v1175 = vld [vmem:[%s5 + $0xc] sm:$0xf]
    %v1176 = vld [vmem:[%s5 + $0x10] sm:$0xf]
    %v1177 = vld [vmem:[%s5 + $0x14] sm:$0xf]
    %v1178 = vld [vmem:[%s5 + $0x18] sm:$0xf]
    %v1179 = vld [vmem:[%s5 + $0x1c] sm:$0xf]
    %v1180 = vld [vmem:[%s5 + $0x20] sm:$0xf]
    %v1181 = vld [vmem:[%s5 + $0x24] sm:$0xf]
    %v1182 = vld [vmem:[%s5 + $0x28] sm:$0xf]
    %v1183 = vld [vmem:[%s5 + $0x2c] sm:$0xf]
    %v1184 = vld [vmem:[%s5 + $0x30] sm:$0xf]
    %v1185 = vld [vmem:[%s5 + $0x34] sm:$0xf]
    %v1186 = vld [vmem:[%s5 + $0x38] sm:$0xf]
    %v1187 = vld [vmem:[%s5 + $0x3c] sm:$0xf]
    %v1188 = vld [vmem:[%s5 + $0x40] sm:$0xf]
    %v1189 = vld [vmem:[%s5 + $0x44] sm:$0xf]
    %v1190 = vld [vmem:[%s5 + $0x48] sm:$0xf]
    %v1191 = vld [vmem:[%s5 + $0x4c] sm:$0xf]
    %v1192 = vld [vmem:[%s5 + $0x50] sm:$0xf]
    %v1193 = vld [vmem:[%s5 + $0x54] sm:$0xf]
    %v1194 = vld [vmem:[%s5 + $0x58] sm:$0xf]
    %v1195 = vld [vmem:[%s5 + $0x5c] sm:$0xf]
    %v1196 = vld [vmem:[%s5 + $0x60] sm:$0xf]
    %v1197 = vld [vmem:[%s5 + $0x64] sm:$0xf]
    %v1198 = vld [vmem:[%s5 + $0x68] sm:$0xf]
    %v1199 = vld [vmem:[%s5 + $0x6c] sm:$0xf]
    %v1200 = vld [vmem:[%s5 + $0x70] sm:$0xf]
    %v1201 = vld [vmem:[%s5 + $0x74] sm:$0xf]
    %v1202 = vld [vmem:[%s5 + $0x78] sm:$0xf]
    %v1203 = vld [vmem:[%s5 + $0x7c] sm:$0xf]
    %v1204 = vld [vmem:[%s6] sm:$0x1]
    %v1206 = vlaneseq
    %v1207 = vshrl.u32 %v1206, 7
    %v1208 = vsub.s32 0, %v1207
    %v1209 = vrot.slane %v1204, %v1208
    %v1243 = vunpack.c.l.b16 %v1172
    %v1244 = vunpack.c.l.b16 %v1173
    %v1245 = vunpack.c.l.b16 %v1174
    %v1246 = vunpack.c.l.b16 %v1175
    %v1247 = vunpack.c.l.b16 %v1176
    %v1248 = vunpack.c.l.b16 %v1177
    %v1249 = vunpack.c.l.b16 %v1178
    %v1250 = vunpack.c.l.b16 %v1179
    %v1251 = vunpack.c.l.b16 %v1180
    %v1252 = vunpack.c.l.b16 %v1181
    %v1253 = vunpack.c.l.b16 %v1182
    %v1254 = vunpack.c.l.b16 %v1183
    %v1255 = vunpack.c.l.b16 %v1184
    %v1256 = vunpack.c.l.b16 %v1185
    %v1257 = vunpack.c.l.b16 %v1186
    %v1258 = vunpack.c.l.b16 %v1187
    %v1259 = vunpack.c.l.b16 %v1188
    %v1260 = vunpack.c.l.b16 %v1189
    %v1261 = vunpack.c.l.b16 %v1190
    %v1262 = vunpack.c.l.b16 %v1191
    %v1263 = vunpack.c.l.b16 %v1192
    %v1264 = vunpack.c.l.b16 %v1193
    %v1265 = vunpack.c.l.b16 %v1194
    %v1266 = vunpack.c.l.b16 %v1195
    %v1267 = vunpack.c.l.b16 %v1196
    %v1268 = vunpack.c.l.b16 %v1197
    %v1269 = vunpack.c.l.b16 %v1198
    %v1270 = vunpack.c.l.b16 %v1199
    %v1271 = vunpack.c.l.b16 %v1200
    %v1272 = vunpack.c.l.b16 %v1201
    %v1273 = vunpack.c.l.b16 %v1202
    %v1274 = vunpack.c.l.b16 %v1203
    %v1275 = vpack.c.b16 %v1244, %v1243
    %v1276 = vpack.c.b16 %v1246, %v1245
    %v1277 = vpack.c.b16 %v1248, %v1247
    %v1278 = vpack.c.b16 %v1250, %v1249
    %v1279 = vpack.c.b16 %v1252, %v1251
    %v1280 = vpack.c.b16 %v1254, %v1253
    %v1281 = vpack.c.b16 %v1256, %v1255
    %v1282 = vpack.c.b16 %v1258, %v1257
    %v1283 = vpack.c.b16 %v1260, %v1259
    %v1284 = vpack.c.b16 %v1262, %v1261
    %v1285 = vpack.c.b16 %v1264, %v1263
    %v1286 = vpack.c.b16 %v1266, %v1265
    %v1287 = vpack.c.b16 %v1268, %v1267
    %v1288 = vpack.c.b16 %v1270, %v1269
    %v1289 = vpack.c.b16 %v1272, %v1271
    %v1290 = vpack.c.b16 %v1274, %v1273
    %1307 = vmatprep.subr.bf16.mxu0 0
    %1308 = vmatpush1.bf16.msra.mxu0 %v1275
    %1309 = vmatprep.subr.bf16.mxu0 0
    %1310 = vmatpush1.bf16.msra.mxu0 %v1276
    %1311 = vmatprep.subr.bf16.mxu0 0
    %1312 = vmatpush1.bf16.msra.mxu0 %v1277
    %1313 = vmatprep.subr.bf16.mxu0 0
    %1314 = vmatpush1.bf16.msra.mxu0 %v1278
    %1315 = vmatprep.subr.bf16.mxu0 0
    %1316 = vmatpush1.bf16.msra.mxu0 %v1279
    %1317 = vmatprep.subr.bf16.mxu0 0
    %1318 = vmatpush1.bf16.msra.mxu0 %v1280
    %1319 = vmatprep.subr.bf16.mxu0 0
    %1320 = vmatpush1.bf16.msra.mxu0 %v1281
    %1321 = vmatprep.subr.bf16.mxu0 0
    %1322 = vmatpush1.bf16.msra.mxu0 %v1282
    %1323 = vmatprep.subr.bf16.mxu0 0
    %1324 = vmatpush1.bf16.msra.mxu0 %v1283
    %1325 = vmatprep.subr.bf16.mxu0 0
    %1326 = vmatpush1.bf16.msra.mxu0 %v1284
    %1327 = vmatprep.subr.bf16.mxu0 0
    %1328 = vmatpush1.bf16.msra.mxu0 %v1285
    %1329 = vmatprep.subr.bf16.mxu0 0
    %1330 = vmatpush1.bf16.msra.mxu0 %v1286
    %1331 = vmatprep.subr.bf16.mxu0 0
    %1332 = vmatpush1.bf16.msra.mxu0 %v1287
    %1333 = vmatprep.subr.bf16.mxu0 0
    %1334 = vmatpush1.bf16.msra.mxu0 %v1288
    %1335 = vmatprep.subr.bf16.mxu0 0
    %1336 = vmatpush1.bf16.msra.mxu0 %v1289
    %1337 = vmatprep.subr.bf16.mxu0 0
    %1338 = vmatpush1.bf16.msra.mxu0 %v1290
    %1339 = vmatprep.mubr.bf16.mxu0 %v1171
    %1340 = vmatmul.mubr.bf16.gmra.mrb[0].mxu0 %v1170
    %v1341 = vpop.f32.mrb[0].mxu0
    %v1342 = vadd.f32 %v1209, %v1341
    %v1343 = vpop.f32.mrb[0].mxu0
    %v1344 = vpop.f32.mrb[0].mxu0
    %v1345 = vpop.f32.mrb[0].mxu0
    %1346 = vdwg.mxu0
    %1347 = vst [vmem:[#allocation5] sm:$0xff] %v1342
    // Predicated region
    $region34: #{net_forward.1} parent=1 // pred_check
      _
    $region35: #{net_forward.1} parent=1 // pred_check_branch
      %1349 = sbr.rel (0) target = $region37
    $region36: #{net_forward.1} parent=1 // pred_region
      %s1351 = ssub.s32 128, 128
      %1352 = vsyncadd [#allocation4], %s1351
      %s1354 = sshll.u32 [#allocation5], 4
      %s1355 = int_to_ptr.vmem [resolvable:$true] %s1354
      %1357 = dma.vmem_to_hbm [thread:$0]  %s1355, 128, %s7, [#allocation4]
    $region37: #{net_forward.1} parent=1 // pred_fallthru
      _
    // Predicated region
    $region38: #{net_forward.1} parent=1 // pred_check
      _
    $region39: #{net_forward.1} parent=1 // pred_check_branch
      %1359 = sbr.rel (0) target = $region41
    $region40: #{net_forward.1} parent=1 // pred_region
      %1360 = dma.done [#allocation4], 128
    $region41: #{net_forward.1} parent=1 // pred_fallthru
      _
    %1361 = vsyncpa [#allocation3], 1
    %1362 = vsyncpa [#allocation4], 1

</llo_original>
